<compile_context>
chip_gen: v7x
topology: tpu7x:2x2x1
jax: 0.10.0
libtpu: 0.0.40
codegen_flags: <defaults>
</compile_context>

<pallas_src>
import functools

import jax
import jax.numpy as jnp
from jax.experimental import pallas as pl
from jax.experimental.pallas import tpu as pltpu


# ----------------------------- fused kernel ---------------------------------
def _token_select_kernel(x_ref, w_ref, b_ref, o_ref, *, top_k, num_tokens):
    """Fused score -> top-k -> gather for one batch element.

    x_ref: (T, E)     tokens of this batch element, resident in VMEM
    w_ref: (1, E)     score_net weight row (VMEM)
    b_ref: (1, 1)     score_net bias (SMEM scalar)
    o_ref: (top_k, E) selected tokens (descending score order)
    """
    T = num_tokens
    x = x_ref[...]                                   # (T, E), original dtype
    xf = x.astype(jnp.float32)
    w = w_ref[...].astype(jnp.float32)               # (1, E), broadcast over T

    # Scores: VPU multiply + XLU lane reduction -> (T, 1) column kept in VMEM.
    s = jnp.sum(xf * w, axis=-1, keepdims=True) + b_ref[0, 0]

    row_idx = jax.lax.broadcasted_iota(jnp.int32, (T, 1), 0)
    neg_inf = jnp.float32(-jnp.inf)

    # top_k is small & static -> unrolled max+mask selection, descending order
    # (lowest index wins ties, matching lax.top_k / torch.topk behaviour).
    for k in range(top_k):
        m = jnp.max(s, axis=0, keepdims=True)                        # (1, 1)
        amax = jnp.min(jnp.where(s == m, row_idx, T),
                       axis=0, keepdims=True)                        # (1, 1)
        sel = row_idx == amax                                        # (T, 1)
        # Gather the selected row from the VMEM-resident block with a one-hot
        # masked reduction (vectorized; no extra HBM traffic, no dynamic DMA).
        row = jnp.sum(jnp.where(sel, x, 0.0), axis=0, keepdims=True)  # (1, E)
        o_ref[pl.ds(k, 1), :] = row.astype(o_ref.dtype)
        s = jnp.where(sel, neg_inf, s)                               # mask out


# ----------------------------- module wrapper --------------------------------
def token_selection(x, w, bias, top_k):
    """Equivalent of TokenSelection.forward.

    x:    (b, t, n, e) float array
    w:    (1, e)  score_net weight (nn.Linear(e, 1).weight layout)
    bias: (1, 1)  score_net bias
    returns (b, top_k, e)
    """
    b, t, n, e = x.shape
    T = t * n
    x_flat = x.reshape(b, T, e)

    # Resident (T, e) block is double-buffered by the pipeline; size the VMEM
    # limit for it and cap at v7x's 64 MiB physical VMEM so the same kernel
    # runs on v5e / v6e / v7x.
    block_bytes = T * e * x_flat.dtype.itemsize
    vmem_limit = int(min(max(4 * block_bytes + (2 << 20), 32 << 20), 64 << 20))

    kernel = functools.partial(_token_select_kernel, top_k=top_k, num_tokens=T)
    return pl.pallas_call(
        kernel,
        out_shape=jax.ShapeDtypeStruct((b, top_k, e), x.dtype),
        grid=(b,),
        in_specs=[
            pl.BlockSpec((None, T, e), lambda bi: (bi, 0, 0)),   # per-batch block
            pl.BlockSpec((1, e), lambda bi: (0, 0)),             # weight row
            pl.BlockSpec(memory_space=pltpu.MemorySpace.SMEM),   # bias scalar
        ],
        out_specs=pl.BlockSpec((None, top_k, e), lambda bi: (bi, 0, 0)),
        compiler_params=pltpu.CompilerParams(
            dimension_semantics=("parallel",),     # megacore sharding on v7x
            vmem_limit_bytes=vmem_limit,
        ),
    )(x_flat, w, bias)


# ----------------------------- reference (pure JAX) --------------------------
def token_selection_ref(x, w, bias, top_k):
    b, t, n, e = x.shape
    scores = jnp.einsum("btne,e->btn", x, w[0]) + bias[0, 0]
    scores = scores.reshape(b, -1)
    _, idx = jax.lax.top_k(scores, top_k)
    x_flat = x.reshape(b, t * n, e)
    return jnp.take_along_axis(x_flat, idx[..., None], axis=1)


if __name__ == "__main__":
    # small shapes consistent with the module's forward: (b, t, n, e)
    B, T_FRAMES, N_TOKENS, E = 2, 4, 16, 32
    TOP_K = 6

    key = jax.random.PRNGKey(0)
    kx, kw = jax.random.split(key)

    x = jax.random.normal(kx, (B, T_FRAMES, N_TOKENS, E), dtype=jnp.float32)

    # deterministic nn.Linear(E, 1) params; bias zeroed per init_weights()
    bound = 1.0 / (E ** 0.5)
    w = jax.random.uniform(kw, (1, E), dtype=jnp.float32, minval=-bound, maxval=bound)
    bias = jnp.zeros((1, 1), dtype=jnp.float32)

    out = token_selection(x, w, bias, TOP_K)
    out = jax.block_until_ready(out)

    ref = token_selection_ref(x, w, bias, TOP_K)
    assert out.shape == (B, TOP_K, E), out.shape
    assert jnp.allclose(out, ref, atol=1e-5, rtol=1e-5), "mismatch vs reference"

    print("KERNEL_OK")
</pallas_src>

<mosaic_0001>
module attributes {stable_mosaic.version = 11 : i64} {
  func.func @_token_select_kernel(%arg0: i32, %arg1: memref<1x64x32xf32, #tpu.memory_space<vmem>>, %arg2: memref<1x32xf32, #tpu.memory_space<vmem>>, %arg3: memref<1x1xf32, #tpu.memory_space<smem>>, %arg4: memref<1x6x32xf32, #tpu.memory_space<vmem>>) attributes {dimension_semantics = [#tpu.dimension_semantics<parallel>], iteration_bounds = array<i64: 2>, scalar_prefetch = 0 : i64, scratch_operands = 0 : i64, tpu.core_type = #tpu.core_type<tc>, window_params = [{transform_indices = @transform_0, window_bounds = array<i64: 1, 64, 32>}, {pipeline_mode = #tpu.pipeline_mode<synchronous>, transform_indices = @transform_1, window_bounds = array<i64: 1, 32>}, {transform_indices = @transform_2, window_bounds = array<i64: 1, 1>}, {transform_indices = @transform_3, window_bounds = array<i64: 1, 6, 32>}]} {
    %c0 = arith.constant 0 : index
    %c0_0 = arith.constant 0 : index
    %c0_1 = arith.constant 0 : index
    %0 = vector.load %arg1[%c0, %c0_0, %c0_1] : memref<1x64x32xf32, #tpu.memory_space<vmem>>, vector<1x64x32xf32>
    %1 = vector.shape_cast %0 : vector<1x64x32xf32> to vector<64x32xf32>
    %c0_2 = arith.constant 0 : index
    %c0_3 = arith.constant 0 : index
    %2 = vector.load %arg2[%c0_2, %c0_3] : memref<1x32xf32, #tpu.memory_space<vmem>>, vector<1x32xf32>
    %3 = vector.broadcast %2 : vector<1x32xf32> to vector<64x32xf32>
    %4 = arith.mulf %1, %3 : vector<64x32xf32>
    %cst = arith.constant dense<0.000000e+00> : vector<64xf32>
    %5 = vector.multi_reduction <add>, %4, %cst [1] : vector<64x32xf32> to vector<64xf32>
    %6 = vector.shape_cast %5 : vector<64xf32> to vector<64x1xf32>
    %c0_4 = arith.constant 0 : index
    %c0_5 = arith.constant 0 : index
    %7 = memref.load %arg3[%c0_4, %c0_5] : memref<1x1xf32, #tpu.memory_space<smem>>
    %8 = vector.broadcast %7 : f32 to vector<64x1xf32>
    %9 = arith.addf %6, %8 : vector<64x1xf32>
    %10 = tpu.iota {dimensions = array<i32: 0>} : vector<64x1xi32>
    %cst_6 = arith.constant dense<0xFF800000> : vector<1xf32>
    %11 = vector.multi_reduction <maximumf>, %9, %cst_6 [0] : vector<64x1xf32> to vector<1xf32>
    %12 = vector.shape_cast %11 : vector<1xf32> to vector<1x1xf32>
    %13 = vector.broadcast %12 : vector<1x1xf32> to vector<64x1xf32>
    %14 = arith.cmpf oeq, %9, %13 : vector<64x1xf32>
    %c64_i32 = arith.constant 64 : i32
    %15 = vector.broadcast %c64_i32 : i32 to vector<64x1xi32>
    %16 = arith.select %14, %10, %15 : vector<64x1xi1>, vector<64x1xi32>
    %cst_7 = arith.constant dense<2147483647> : vector<1xi32>
    %17 = vector.multi_reduction <minsi>, %16, %cst_7 [0] : vector<64x1xi32> to vector<1xi32>
    %18 = vector.shape_cast %17 : vector<1xi32> to vector<1x1xi32>
    %19 = vector.broadcast %18 : vector<1x1xi32> to vector<64x1xi32>
    %20 = arith.cmpi eq, %10, %19 : vector<64x1xi32>
    %cst_8 = arith.constant 0.000000e+00 : f32
    %21 = vector.shape_cast %20 : vector<64x1xi1> to vector<64x1xi1>
    %22 = vector.broadcast %21 : vector<64x1xi1> to vector<64x32xi1>
    %23 = vector.broadcast %cst_8 : f32 to vector<64x32xf32>
    %24 = arith.select %22, %1, %23 : vector<64x32xi1>, vector<64x32xf32>
    %cst_9 = arith.constant dense<0.000000e+00> : vector<32xf32>
    %25 = vector.multi_reduction <add>, %24, %cst_9 [0] : vector<64x32xf32> to vector<32xf32>
    %26 = vector.shape_cast %25 : vector<32xf32> to vector<1x32xf32>
    %c0_10 = arith.constant 0 : index
    %c0_11 = arith.constant 0 : index
    %c0_12 = arith.constant 0 : index
    %27 = vector.load %arg4[%c0_10, %c0_11, %c0_12] : memref<1x6x32xf32, #tpu.memory_space<vmem>>, vector<1x1x32xf32>
    %28 = vector.shape_cast %27 : vector<1x1x32xf32> to vector<1x32xf32>
    %29 = vector.shape_cast %26 : vector<1x32xf32> to vector<1x1x32xf32>
    tpu.vector_store %arg4[%c0_10, %c0_11, %c0_12], %29 {strides = array<i32>} : memref<1x6x32xf32, #tpu.memory_space<vmem>>, vector<1x1x32xf32>,
    %cst_13 = arith.constant 0xFF800000 : f32
    %30 = vector.broadcast %cst_13 : f32 to vector<64x1xf32>
    %31 = arith.select %20, %30, %9 : vector<64x1xi1>, vector<64x1xf32>
    %cst_14 = arith.constant dense<0xFF800000> : vector<1xf32>
    %32 = vector.multi_reduction <maximumf>, %31, %cst_14 [0] : vector<64x1xf32> to vector<1xf32>
    %33 = vector.shape_cast %32 : vector<1xf32> to vector<1x1xf32>
    %34 = vector.broadcast %33 : vector<1x1xf32> to vector<64x1xf32>
    %35 = arith.cmpf oeq, %31, %34 : vector<64x1xf32>
    %c64_i32_15 = arith.constant 64 : i32
    %36 = vector.broadcast %c64_i32_15 : i32 to vector<64x1xi32>
    %37 = arith.select %35, %10, %36 : vector<64x1xi1>, vector<64x1xi32>
    %cst_16 = arith.constant dense<2147483647> : vector<1xi32>
    %38 = vector.multi_reduction <minsi>, %37, %cst_16 [0] : vector<64x1xi32> to vector<1xi32>
    %39 = vector.shape_cast %38 : vector<1xi32> to vector<1x1xi32>
    %40 = vector.broadcast %39 : vector<1x1xi32> to vector<64x1xi32>
    %41 = arith.cmpi eq, %10, %40 : vector<64x1xi32>
    %cst_17 = arith.constant 0.000000e+00 : f32
    %42 = vector.shape_cast %41 : vector<64x1xi1> to vector<64x1xi1>
    %43 = vector.broadcast %42 : vector<64x1xi1> to vector<64x32xi1>
    %44 = vector.broadcast %cst_17 : f32 to vector<64x32xf32>
    %45 = arith.select %43, %1, %44 : vector<64x32xi1>, vector<64x32xf32>
    %cst_18 = arith.constant dense<0.000000e+00> : vector<32xf32>
    %46 = vector.multi_reduction <add>, %45, %cst_18 [0] : vector<64x32xf32> to vector<32xf32>
    %47 = vector.shape_cast %46 : vector<32xf32> to vector<1x32xf32>
    %c0_19 = arith.constant 0 : index
    %c1 = arith.constant 1 : index
    %c0_20 = arith.constant 0 : index
    %48 = vector.load %arg4[%c0_19, %c1, %c0_20] : memref<1x6x32xf32, #tpu.memory_space<vmem>>, vector<1x1x32xf32>
    %49 = vector.shape_cast %48 : vector<1x1x32xf32> to vector<1x32xf32>
    %50 = vector.shape_cast %47 : vector<1x32xf32> to vector<1x1x32xf32>
    tpu.vector_store %arg4[%c0_19, %c1, %c0_20], %50 {strides = array<i32>} : memref<1x6x32xf32, #tpu.memory_space<vmem>>, vector<1x1x32xf32>,
    %cst_21 = arith.constant 0xFF800000 : f32
    %51 = vector.broadcast %cst_21 : f32 to vector<64x1xf32>
    %52 = arith.select %41, %51, %31 : vector<64x1xi1>, vector<64x1xf32>
    %cst_22 = arith.constant dense<0xFF800000> : vector<1xf32>
    %53 = vector.multi_reduction <maximumf>, %52, %cst_22 [0] : vector<64x1xf32> to vector<1xf32>
    %54 = vector.shape_cast %53 : vector<1xf32> to vector<1x1xf32>
    %55 = vector.broadcast %54 : vector<1x1xf32> to vector<64x1xf32>
    %56 = arith.cmpf oeq, %52, %55 : vector<64x1xf32>
    %c64_i32_23 = arith.constant 64 : i32
    %57 = vector.broadcast %c64_i32_23 : i32 to vector<64x1xi32>
    %58 = arith.select %56, %10, %57 : vector<64x1xi1>, vector<64x1xi32>
    %cst_24 = arith.constant dense<2147483647> : vector<1xi32>
    %59 = vector.multi_reduction <minsi>, %58, %cst_24 [0] : vector<64x1xi32> to vector<1xi32>
    %60 = vector.shape_cast %59 : vector<1xi32> to vector<1x1xi32>
    %61 = vector.broadcast %60 : vector<1x1xi32> to vector<64x1xi32>
    %62 = arith.cmpi eq, %10, %61 : vector<64x1xi32>
    %cst_25 = arith.constant 0.000000e+00 : f32
    %63 = vector.shape_cast %62 : vector<64x1xi1> to vector<64x1xi1>
    %64 = vector.broadcast %63 : vector<64x1xi1> to vector<64x32xi1>
    %65 = vector.broadcast %cst_25 : f32 to vector<64x32xf32>
    %66 = arith.select %64, %1, %65 : vector<64x32xi1>, vector<64x32xf32>
    %cst_26 = arith.constant dense<0.000000e+00> : vector<32xf32>
    %67 = vector.multi_reduction <add>, %66, %cst_26 [0] : vector<64x32xf32> to vector<32xf32>
    %68 = vector.shape_cast %67 : vector<32xf32> to vector<1x32xf32>
    %c0_27 = arith.constant 0 : index
    %c2 = arith.constant 2 : index
    %c0_28 = arith.constant 0 : index
    %69 = vector.load %arg4[%c0_27, %c2, %c0_28] : memref<1x6x32xf32, #tpu.memory_space<vmem>>, vector<1x1x32xf32>
    %70 = vector.shape_cast %69 : vector<1x1x32xf32> to vector<1x32xf32>
    %71 = vector.shape_cast %68 : vector<1x32xf32> to vector<1x1x32xf32>
    tpu.vector_store %arg4[%c0_27, %c2, %c0_28], %71 {strides = array<i32>} : memref<1x6x32xf32, #tpu.memory_space<vmem>>, vector<1x1x32xf32>,
    %cst_29 = arith.constant 0xFF800000 : f32
    %72 = vector.broadcast %cst_29 : f32 to vector<64x1xf32>
    %73 = arith.select %62, %72, %52 : vector<64x1xi1>, vector<64x1xf32>
    %cst_30 = arith.constant dense<0xFF800000> : vector<1xf32>
    %74 = vector.multi_reduction <maximumf>, %73, %cst_30 [0] : vector<64x1xf32> to vector<1xf32>
    %75 = vector.shape_cast %74 : vector<1xf32> to vector<1x1xf32>
    %76 = vector.broadcast %75 : vector<1x1xf32> to vector<64x1xf32>
    %77 = arith.cmpf oeq, %73, %76 : vector<64x1xf32>
    %c64_i32_31 = arith.constant 64 : i32
    %78 = vector.broadcast %c64_i32_31 : i32 to vector<64x1xi32>
    %79 = arith.select %77, %10, %78 : vector<64x1xi1>, vector<64x1xi32>
    %cst_32 = arith.constant dense<2147483647> : vector<1xi32>
    %80 = vector.multi_reduction <minsi>, %79, %cst_32 [0] : vector<64x1xi32> to vector<1xi32>
    %81 = vector.shape_cast %80 : vector<1xi32> to vector<1x1xi32>
    %82 = vector.broadcast %81 : vector<1x1xi32> to vector<64x1xi32>
    %83 = arith.cmpi eq, %10, %82 : vector<64x1xi32>
    %cst_33 = arith.constant 0.000000e+00 : f32
    %84 = vector.shape_cast %83 : vector<64x1xi1> to vector<64x1xi1>
    %85 = vector.broadcast %84 : vector<64x1xi1> to vector<64x32xi1>
    %86 = vector.broadcast %cst_33 : f32 to vector<64x32xf32>
    %87 = arith.select %85, %1, %86 : vector<64x32xi1>, vector<64x32xf32>
    %cst_34 = arith.constant dense<0.000000e+00> : vector<32xf32>
    %88 = vector.multi_reduction <add>, %87, %cst_34 [0] : vector<64x32xf32> to vector<32xf32>
    %89 = vector.shape_cast %88 : vector<32xf32> to vector<1x32xf32>
    %c0_35 = arith.constant 0 : index
    %c3 = arith.constant 3 : index
    %c0_36 = arith.constant 0 : index
    %90 = vector.load %arg4[%c0_35, %c3, %c0_36] : memref<1x6x32xf32, #tpu.memory_space<vmem>>, vector<1x1x32xf32>
    %91 = vector.shape_cast %90 : vector<1x1x32xf32> to vector<1x32xf32>
    %92 = vector.shape_cast %89 : vector<1x32xf32> to vector<1x1x32xf32>
    tpu.vector_store %arg4[%c0_35, %c3, %c0_36], %92 {strides = array<i32>} : memref<1x6x32xf32, #tpu.memory_space<vmem>>, vector<1x1x32xf32>,
    %cst_37 = arith.constant 0xFF800000 : f32
    %93 = vector.broadcast %cst_37 : f32 to vector<64x1xf32>
    %94 = arith.select %83, %93, %73 : vector<64x1xi1>, vector<64x1xf32>
    %cst_38 = arith.constant dense<0xFF800000> : vector<1xf32>
    %95 = vector.multi_reduction <maximumf>, %94, %cst_38 [0] : vector<64x1xf32> to vector<1xf32>
    %96 = vector.shape_cast %95 : vector<1xf32> to vector<1x1xf32>
    %97 = vector.broadcast %96 : vector<1x1xf32> to vector<64x1xf32>
    %98 = arith.cmpf oeq, %94, %97 : vector<64x1xf32>
    %c64_i32_39 = arith.constant 64 : i32
    %99 = vector.broadcast %c64_i32_39 : i32 to vector<64x1xi32>
    %100 = arith.select %98, %10, %99 : vector<64x1xi1>, vector<64x1xi32>
    %cst_40 = arith.constant dense<2147483647> : vector<1xi32>
    %101 = vector.multi_reduction <minsi>, %100, %cst_40 [0] : vector<64x1xi32> to vector<1xi32>
    %102 = vector.shape_cast %101 : vector<1xi32> to vector<1x1xi32>
    %103 = vector.broadcast %102 : vector<1x1xi32> to vector<64x1xi32>
    %104 = arith.cmpi eq, %10, %103 : vector<64x1xi32>
    %cst_41 = arith.constant 0.000000e+00 : f32
    %105 = vector.shape_cast %104 : vector<64x1xi1> to vector<64x1xi1>
    %106 = vector.broadcast %105 : vector<64x1xi1> to vector<64x32xi1>
    %107 = vector.broadcast %cst_41 : f32 to vector<64x32xf32>
    %108 = arith.select %106, %1, %107 : vector<64x32xi1>, vector<64x32xf32>
    %cst_42 = arith.constant dense<0.000000e+00> : vector<32xf32>
    %109 = vector.multi_reduction <add>, %108, %cst_42 [0] : vector<64x32xf32> to vector<32xf32>
    %110 = vector.shape_cast %109 : vector<32xf32> to vector<1x32xf32>
    %c0_43 = arith.constant 0 : index
    %c4 = arith.constant 4 : index
    %c0_44 = arith.constant 0 : index
    %111 = vector.load %arg4[%c0_43, %c4, %c0_44] : memref<1x6x32xf32, #tpu.memory_space<vmem>>, vector<1x1x32xf32>
    %112 = vector.shape_cast %111 : vector<1x1x32xf32> to vector<1x32xf32>
    %113 = vector.shape_cast %110 : vector<1x32xf32> to vector<1x1x32xf32>
    tpu.vector_store %arg4[%c0_43, %c4, %c0_44], %113 {strides = array<i32>} : memref<1x6x32xf32, #tpu.memory_space<vmem>>, vector<1x1x32xf32>,
    %cst_45 = arith.constant 0xFF800000 : f32
    %114 = vector.broadcast %cst_45 : f32 to vector<64x1xf32>
    %115 = arith.select %104, %114, %94 : vector<64x1xi1>, vector<64x1xf32>
    %cst_46 = arith.constant dense<0xFF800000> : vector<1xf32>
    %116 = vector.multi_reduction <maximumf>, %115, %cst_46 [0] : vector<64x1xf32> to vector<1xf32>
    %117 = vector.shape_cast %116 : vector<1xf32> to vector<1x1xf32>
    %118 = vector.broadcast %117 : vector<1x1xf32> to vector<64x1xf32>
    %119 = arith.cmpf oeq, %115, %118 : vector<64x1xf32>
    %c64_i32_47 = arith.constant 64 : i32
    %120 = vector.broadcast %c64_i32_47 : i32 to vector<64x1xi32>
    %121 = arith.select %119, %10, %120 : vector<64x1xi1>, vector<64x1xi32>
    %cst_48 = arith.constant dense<2147483647> : vector<1xi32>
    %122 = vector.multi_reduction <minsi>, %121, %cst_48 [0] : vector<64x1xi32> to vector<1xi32>
    %123 = vector.shape_cast %122 : vector<1xi32> to vector<1x1xi32>
    %124 = vector.broadcast %123 : vector<1x1xi32> to vector<64x1xi32>
    %125 = arith.cmpi eq, %10, %124 : vector<64x1xi32>
    %cst_49 = arith.constant 0.000000e+00 : f32
    %126 = vector.shape_cast %125 : vector<64x1xi1> to vector<64x1xi1>
    %127 = vector.broadcast %126 : vector<64x1xi1> to vector<64x32xi1>
    %128 = vector.broadcast %cst_49 : f32 to vector<64x32xf32>
    %129 = arith.select %127, %1, %128 : vector<64x32xi1>, vector<64x32xf32>
    %cst_50 = arith.constant dense<0.000000e+00> : vector<32xf32>
    %130 = vector.multi_reduction <add>, %129, %cst_50 [0] : vector<64x32xf32> to vector<32xf32>
    %131 = vector.shape_cast %130 : vector<32xf32> to vector<1x32xf32>
    %c0_51 = arith.constant 0 : index
    %c5 = arith.constant 5 : index
    %c0_52 = arith.constant 0 : index
    %132 = vector.load %arg4[%c0_51, %c5, %c0_52] : memref<1x6x32xf32, #tpu.memory_space<vmem>>, vector<1x1x32xf32>
    %133 = vector.shape_cast %132 : vector<1x1x32xf32> to vector<1x32xf32>
    %134 = vector.shape_cast %131 : vector<1x32xf32> to vector<1x1x32xf32>
    tpu.vector_store %arg4[%c0_51, %c5, %c0_52], %134 {strides = array<i32>} : memref<1x6x32xf32, #tpu.memory_space<vmem>>, vector<1x1x32xf32>,
    return
  }
  func.func @transform_0(%arg0: i32) -> (i32, i32, i32) {
    %c0_i32 = arith.constant 0 : i32
    %c0_i32_0 = arith.constant 0 : i32
    %c0_i32_1 = arith.constant 0 : i32
    return %arg0, %c0_i32, %c0_i32_0 : i32, i32, i32
  }
  func.func @transform_1(%arg0: i32) -> (i32, i32) {
    %c0_i32 = arith.constant 0 : i32
    %c0_i32_0 = arith.constant 0 : i32
    %c0_i32_1 = arith.constant 0 : i32
    return %c0_i32, %c0_i32_0 : i32, i32
  }
  func.func @transform_2(%arg0: i32) -> (i32, i32) {
    %c0_i32 = arith.constant 0 : i32
    %c0_i32_0 = arith.constant 0 : i32
    %c0_i32_1 = arith.constant 0 : i32
    return %c0_i32, %c0_i32_0 : i32, i32
  }
  func.func @transform_3(%arg0: i32) -> (i32, i32, i32) {
    %c0_i32 = arith.constant 0 : i32
    %c0_i32_0 = arith.constant 0 : i32
    %c0_i32_1 = arith.constant 0 : i32
    return %arg0, %c0_i32, %c0_i32_0 : i32, i32, i32
  }
}

</mosaic_0001>

<llo_original>
// kernel: tpu_custom_call.1
$region0: #{tpu_custom_call.1}
  #allocation0 [shape = 'u32[]', space=smem, size = 0x4, offset = 0x4, fixed_abs, tag = 'smem constant byte address 0x4 - core index']
  #allocation1 [shape = 'u32[144,128]{1,0:T(1,128)}', space=vmem, size = 0x12000, scoped, tag = 'internal scratch']
  #allocation2 [shape = 'f32[1,1]{1,0:T(1,128)S(6)}', space=smem, size = 0x200, scoped, tag = 'scoped memory for tpu_custom_call.1']
  %s0 = inlined_call_operand.vmem [shape: f32[2,64,32], index: 0, kind: input, shape index: {}]
  %s1 = inlined_call_operand.vmem [shape: f32[1,32], index: 1, kind: input, shape index: {}]
  %s2 = inlined_call_operand.<no memory space> [shape: f32[1,1], index: 2, kind: input, shape index: {}]
  %s3 = inlined_call_operand.vmem [shape: f32[2,6,32], index: 3, kind: output, shape index: {}]
  %s4 = sld [smem:[#allocation0]]
  $region45: #{tpu_custom_call.1} parent=0
    _
  %s6 = ssub.s32 1, %s4
  %s7 = scalar_select 0, %s6, %s4
  %8 = sst [smem:[#allocation2]] %s2
  loop: start=0, step=1, limit=4
  $region2: #{tpu_custom_call.1} parent=0 // loop_pre_header
    _
  $region3: #{tpu_custom_call.1} parent=0 // loop_header
    %s10 = sphi 0, %s14
    %p11 = scmp.ge.s32.totalorder %s10, 4
    %s20 = sphi 0, %s22
    %s23 = sphi 0, %s20
    %s24 = sphi 0, %s23
    %s40 = sphi 0, %s24
    %s44 = sphi 0, %s44
    %s46 = sphi 0, %s44
    %s47 = sphi 0, %s46
    %s61 = sphi 0, %s47
    %s65 = sphi 0, %s65
    %s67 = sphi 0, %s65
    %s68 = sphi 0, %s67
    %s82 = sphi 0, %s68
    %s88 = sphi 0, %s90
    %s91 = sphi 0, %s88
    %s92 = sphi 0, %s91
    %s108 = sphi 0, %s92
  $region4: #{tpu_custom_call.1} parent=0 // loop_header_branch
    %13 = sbr.rel (%p11) target = $region8
  $region5: #{tpu_custom_call.1} parent=0 // loop_body
    %s15 = ssub.s32 %s10, 1
    %s16 = ssub.s32 %s10, 2
    %s17 = sadd.s32 %s10, 1
    %s18 = ssub.s32 %s10, %s17
    %p19 = scmp.eq.s32.totalorder %s18, 0
    %s21 = sadd.s32 %s20, 1
    %s22 = scalar_select %p19, %s20, %s21
    %p25 = pneg %p19
    %p26 = scmp.eq.s32.totalorder %s10, 1
    %p27 = por %p25, %p26
    %p28 = scmp.ne.s32.totalorder %s20, %s23
    %p29 = scmp.eq.s32.totalorder %s10, 0
    %p30 = por %p28, %p29
    %p31 = scmp.ne.s32.totalorder %s20, %s23
    %p32 = scmp.eq.s32.totalorder %s15, 1
    %p33 = por %p31, %p32
    %p34 = scmp.ne.s32.totalorder %s23, %s24
    %p35 = scmp.eq.s32.totalorder %s15, 0
    %p36 = por %p34, %p35
    %p37 = scmp.ne.s32.totalorder %s23, %s24
    %p38 = scmp.eq.s32.totalorder %s16, 1
    %p39 = por %p37, %p38
    %p41 = scmp.ne.s32.totalorder %s24, %s40
    %p42 = scmp.eq.s32.totalorder %s16, 0
    %p43 = por %p41, %p42
    %s45 = sadd.s32 %s44, 1
    %p48 = scmp.eq.s32.totalorder %s10, 1
    %p49 = scmp.ne.s32.totalorder %s44, %s46
    %p50 = scmp.eq.s32.totalorder %s10, 0
    %p51 = por %p49, %p50
    %p52 = scmp.ne.s32.totalorder %s44, %s46
    %p53 = scmp.eq.s32.totalorder %s15, 1
    %p54 = por %p52, %p53
    %p55 = scmp.ne.s32.totalorder %s46, %s47
    %p56 = scmp.eq.s32.totalorder %s15, 0
    %p57 = por %p55, %p56
    %p58 = scmp.ne.s32.totalorder %s46, %s47
    %p59 = scmp.eq.s32.totalorder %s16, 1
    %p60 = por %p58, %p59
    %p62 = scmp.ne.s32.totalorder %s47, %s61
    %p63 = scmp.eq.s32.totalorder %s16, 0
    %p64 = por %p62, %p63
    %s66 = sadd.s32 %s65, 1
    %p69 = scmp.eq.s32.totalorder %s10, 1
    %p70 = scmp.ne.s32.totalorder %s65, %s67
    %p71 = scmp.eq.s32.totalorder %s10, 0
    %p72 = por %p70, %p71
    %p73 = scmp.ne.s32.totalorder %s65, %s67
    %p74 = scmp.eq.s32.totalorder %s15, 1
    %p75 = por %p73, %p74
    %p76 = scmp.ne.s32.totalorder %s67, %s68
    %p77 = scmp.eq.s32.totalorder %s15, 0
    %p78 = por %p76, %p77
    %p79 = scmp.ne.s32.totalorder %s67, %s68
    %p80 = scmp.eq.s32.totalorder %s16, 1
    %p81 = por %p79, %p80
    %p83 = scmp.ne.s32.totalorder %s68, %s82
    %p84 = scmp.eq.s32.totalorder %s16, 0
    %p85 = por %p83, %p84
    %s86 = ssub.s32 %s10, %s17
    %p87 = scmp.eq.s32.totalorder %s86, 0
    %s89 = sadd.s32 %s88, 1
    %s90 = scalar_select %p87, %s88, %s89
    %p93 = pneg %p87
    %p94 = scmp.eq.s32.totalorder %s10, 1
    %p95 = por %p93, %p94
    %p96 = scmp.ne.s32.totalorder %s88, %s91
    %p97 = scmp.eq.s32.totalorder %s10, 0
    %p98 = por %p96, %p97
    %p99 = scmp.ne.s32.totalorder %s88, %s91
    %p100 = scmp.eq.s32.totalorder %s15, 1
    %p101 = por %p99, %p100
    %p102 = scmp.ne.s32.totalorder %s91, %s92
    %p103 = scmp.eq.s32.totalorder %s15, 0
    %p104 = por %p102, %p103
    %p105 = scmp.ne.s32.totalorder %s91, %s92
    %p106 = scmp.eq.s32.totalorder %s16, 1
    %p107 = por %p105, %p106
    %p109 = scmp.ne.s32.totalorder %s92, %s108
    %p110 = scmp.eq.s32.totalorder %s16, 0
    %p111 = por %p109, %p110
    %p112 = scmp.le.s32.totalorder 1, %s10
    %p113 = scmp.lt.s32.totalorder %s10, 3
    %p114 = pnand %p112, %p113
    %p115 = pneg %p114
    // Predicated region
    $region9: #{tpu_custom_call.1} parent=5 // pred_check
      _
    $region10: #{tpu_custom_call.1} parent=5 // pred_check_branch
      %117 = sbr.rel (%p114) target = $region12
    $region11: #{tpu_custom_call.1} parent=5 // pred_region
      %s118 = ssub.s32 %s10, 1
      // Predicated region
      $region13: #{tpu_custom_call.1} parent=11 // pred_check
        %p119 = pneg %p57
      $region14: #{tpu_custom_call.1} parent=11 // pred_check_branch
        %121 = sbr.rel (%p119) target = $region16
      $region15: #{tpu_custom_call.1} parent=11 // pred_region
        _
      $region16: #{tpu_custom_call.1} parent=11 // pred_fallthru
        _
      // Predicated region
      $region17: #{tpu_custom_call.1} parent=11 // pred_check
        %p122 = pneg %p78
      $region18: #{tpu_custom_call.1} parent=11 // pred_check_branch
        %124 = sbr.rel (%p122) target = $region20
      $region19: #{tpu_custom_call.1} parent=11 // pred_region
        _
      $region20: #{tpu_custom_call.1} parent=11 // pred_fallthru
        _
    $region12: #{tpu_custom_call.1} parent=5 // pred_fallthru
      _
    %p125 = scmp.lt.s32.totalorder %s10, 2
    // Predicated region
    $region21: #{tpu_custom_call.1} parent=5 // pred_check
      %p126 = pneg %p125
    $region22: #{tpu_custom_call.1} parent=5 // pred_check_branch
      %128 = sbr.rel (%p126) target = $region24
    $region23: #{tpu_custom_call.1} parent=5 // pred_region
      // Predicated region
      $region25: #{tpu_custom_call.1} parent=23 // pred_check
        %p129 = pneg %p30
      $region26: #{tpu_custom_call.1} parent=23 // pred_check_branch
        %131 = sbr.rel (%p129) target = $region28
      $region27: #{tpu_custom_call.1} parent=23 // pred_region
        %p132 = scmp.lt.s32.totalorder %s10, 1
        %s133 = scalar_select %p132, %s10, 1
        %s134 = smul.addr %s133, 8
        %s135 = smul.addr %s134, 8
        %s136 = scalar_lea.vmem %s0, %s135
      $region28: #{tpu_custom_call.1} parent=23 // pred_fallthru
        _
    $region24: #{tpu_custom_call.1} parent=5 // pred_fallthru
      _
    %p137 = scmp.le.s32.totalorder 1, %s10
    %p138 = scmp.lt.s32.totalorder %s10, 3
    %p139 = pnand %p137, %p138
    %p140 = pneg %p139
    // Predicated region
    $region29: #{tpu_custom_call.1} parent=5 // pred_check
      _
    $region30: #{tpu_custom_call.1} parent=5 // pred_check_branch
      %142 = sbr.rel (%p139) target = $region32
    $region31: #{tpu_custom_call.1} parent=5 // pred_region
      %s143 = ssub.s32 %s10, 1
      %p144 = scmp.lt.s32.totalorder %s15, 1
      %s145 = scalar_select %p144, %s15, 1
      %s146 = smul.addr %s145, 8
      %s147 = smul.addr %s146, 8
      %s148 = scalar_lea.vmem %s0, %s147
      %p149 = pneg %p36
      %p150 = pneg %p33
      %p151 = pneg %p57
      %p152 = pneg %p54
      %p153 = pneg %p78
      %p154 = pneg %p75
      %p155 = pneg %p104
      %p156 = pneg %p101
      %p157 = scmp.lt.s32.totalorder %s15, 1
      %s158 = scalar_select %p157, %s15, 1
      %s159 = smul.addr %s158, 8
      %s160 = scalar_lea.vmem %s3, %s159
      %p161 = scmp.lt.s32.totalorder %s15, 1
      %s162 = scalar_select %p161, %s15, 1
      %s163 = smul.addr %s162, 8
      %s164 = smul.addr %s163, 8
      %s165 = scalar_lea.vmem %s0, %s164
      %p166 = scmp.lt.s32.totalorder %s15, 1
      %s167 = scalar_select %p166, %s15, 1
      %s168 = smul.addr %s167, 8
      %s169 = scalar_lea.vmem %s3, %s168
      %v170 = vld [vmem:[%s165] sm:$0xff]
      %v171 = vld [vmem:[%s165 + $0x8] sm:$0xff]
      %v172 = vld [vmem:[%s165 + $0x10] sm:$0xff]
      %v173 = vld [vmem:[%s165 + $0x18] sm:$0xff]
      %v174 = vld [vmem:[%s165 + $0x20] sm:$0xff]
      %v175 = vld [vmem:[%s165 + $0x28] sm:$0xff]
      %v176 = vld [vmem:[%s165 + $0x30] sm:$0xff]
      %v177 = vld [vmem:[%s165 + $0x38] sm:$0xff]
      %v178 = vld [vmem:[%s1] sm:$0x1]
      %v180 = vlaneseq
      %v181 = vshrl.u32 %v180, 7
      %v182 = vsub.s32 0, %v181
      %v183 = vrot.slane %v178, %v182
      %v185 = vmul.f32 %v170, %v183
      %v186 = vmul.f32 %v171, %v183
      %v187 = vmul.f32 %v172, %v183
      %v188 = vmul.f32 %v173, %v183
      %v189 = vmul.f32 %v174, %v183
      %v190 = vmul.f32 %v175, %v183
      %v191 = vmul.f32 %v176, %v183
      %v192 = vmul.f32 %v177, %v183
      %vm193 = vcmask 261120
      %v194 = vsel %vm193, %v185, 0.0
      %195 = vadd.xlane.f32.xlu0 %v194
      %v196 = vpop.xlane.xlu0 %195
      %v197 = vsel %vm193, %v186, 0.0
      %198 = vadd.xlane.f32.xlu0 %v197
      %v199 = vpop.xlane.xlu0 %198
      %v200 = vsel %vm193, %v187, 0.0
      %201 = vadd.xlane.f32.xlu0 %v200
      %v202 = vpop.xlane.xlu0 %201
      %v203 = vsel %vm193, %v188, 0.0
      %204 = vadd.xlane.f32.xlu0 %v203
      %v205 = vpop.xlane.xlu0 %204
      %v206 = vsel %vm193, %v189, 0.0
      %207 = vadd.xlane.f32.xlu0 %v206
      %v208 = vpop.xlane.xlu0 %207
      %v209 = vsel %vm193, %v190, 0.0
      %210 = vadd.xlane.f32.xlu0 %v209
      %v211 = vpop.xlane.xlu0 %210
      %v212 = vsel %vm193, %v191, 0.0
      %213 = vadd.xlane.f32.xlu0 %v212
      %v214 = vpop.xlane.xlu0 %213
      %v215 = vsel %vm193, %v192, 0.0
      %216 = vadd.xlane.f32.xlu0 %v215
      %v217 = vpop.xlane.xlu0 %216
      %s218 = sld [smem:[#allocation2]]
      %v219 = vstv %s218
      %v220 = vadd.f32 %v196, %v219
      %v221 = vadd.f32 %v199, %v219
      %v222 = vadd.f32 %v202, %v219
      %v223 = vadd.f32 %v205, %v219
      %v224 = vadd.f32 %v208, %v219
      %v225 = vadd.f32 %v211, %v219
      %v226 = vadd.f32 %v214, %v219
      %v227 = vadd.f32 %v217, %v219
      %v228 = vlaneseq
      %v229 = vshrl.u32 %v228, 7
      %v230 = vadd.s32 %v229, 8
      %v231 = vadd.s32 %v229, 16
      %v232 = vadd.s32 %v229, 24
      %v233 = vadd.s32 %v229, 32
      %v234 = vadd.s32 %v229, 40
      %v235 = vadd.s32 %v229, 48
      %v236 = vadd.s32 %v229, 56
      %v237 = vmax.f32 %v220, %v224
      %v238 = vmax.f32 %v221, %v225
      %v239 = vmax.f32 %v222, %v226
      %v240 = vmax.f32 %v223, %v227
      %v241 = vmax.f32 %v237, %v238
      %v242 = vmax.f32 %v239, %v240
      %v243 = vmax.f32 %v241, %v242
      %v244 = vrot.slane %v243, 4
      %v245 = vmax.f32 %v243, %v244
      %v246 = vrot.slane %v245, 2
      %v247 = vmax.f32 %v245, %v246
      %v248 = vrot.slane %v247, 1
      %v249 = vmax.f32 %v247, %v248
      %vm250 = vcmp.eq.f32.partialorder %v220, %v249
      %vm251 = vcmp.eq.f32.partialorder %v221, %v249
      %vm252 = vcmp.eq.f32.partialorder %v222, %v249
      %vm253 = vcmp.eq.f32.partialorder %v223, %v249
      %vm254 = vcmp.eq.f32.partialorder %v224, %v249
      %vm255 = vcmp.eq.f32.partialorder %v225, %v249
      %vm256 = vcmp.eq.f32.partialorder %v226, %v249
      %vm257 = vcmp.eq.f32.partialorder %v227, %v249
      %v258 = vsel %vm250, %v229, 64
      %v259 = vsel %vm251, %v230, 64
      %v260 = vsel %vm252, %v231, 64
      %v261 = vsel %vm253, %v232, 64
      %v262 = vsel %vm254, %v233, 64
      %v263 = vsel %vm255, %v234, 64
      %v264 = vsel %vm256, %v235, 64
      %v265 = vsel %vm257, %v236, 64
      %vm266 = vcmp.lt.s32.totalorder %v258, %v262
      %v267 = vsel %vm266, %v258, %v262
      %vm268 = vcmp.lt.s32.totalorder %v259, %v263
      %v269 = vsel %vm268, %v259, %v263
      %vm270 = vcmp.lt.s32.totalorder %v260, %v264
      %v271 = vsel %vm270, %v260, %v264
      %vm272 = vcmp.lt.s32.totalorder %v261, %v265
      %v273 = vsel %vm272, %v261, %v265
      %vm274 = vcmp.lt.s32.totalorder %v267, %v269
      %v275 = vsel %vm274, %v267, %v269
      %vm276 = vcmp.lt.s32.totalorder %v271, %v273
      %v277 = vsel %vm276, %v271, %v273
      %vm278 = vcmp.lt.s32.totalorder %v275, %v277
      %v279 = vsel %vm278, %v275, %v277
      %v280 = vrot.slane %v279, 4
      %vm281 = vcmp.lt.s32.totalorder %v279, %v280
      %v282 = vsel %vm281, %v279, %v280
      %v283 = vrot.slane %v282, 2
      %vm284 = vcmp.lt.s32.totalorder %v282, %v283
      %v285 = vsel %vm284, %v282, %v283
      %v286 = vrot.slane %v285, 1
      %vm287 = vcmp.lt.s32.totalorder %v285, %v286
      %v288 = vsel %vm287, %v285, %v286
      %vm289 = vcmp.eq.s32.totalorder %v229, %v288
      %vm290 = vcmp.eq.s32.totalorder %v230, %v288
      %vm291 = vcmp.eq.s32.totalorder %v231, %v288
      %vm292 = vcmp.eq.s32.totalorder %v232, %v288
      %vm293 = vcmp.eq.s32.totalorder %v233, %v288
      %vm294 = vcmp.eq.s32.totalorder %v234, %v288
      %vm295 = vcmp.eq.s32.totalorder %v235, %v288
      %vm296 = vcmp.eq.s32.totalorder %v236, %v288
      %v297 = vsel %vm289, 1, 0
      %v298 = vsel %vm290, 1, 0
      %v299 = vsel %vm291, 1, 0
      %v300 = vsel %vm292, 1, 0
      %v301 = vsel %vm293, 1, 0
      %v302 = vsel %vm294, 1, 0
      %v303 = vsel %vm295, 1, 0
      %v304 = vsel %vm296, 1, 0
      %vm305 = vcmp.eq.s32.totalorder %v297, 1
      %vm306 = vcmp.eq.s32.totalorder %v298, 1
      %vm307 = vcmp.eq.s32.totalorder %v299, 1
      %vm308 = vcmp.eq.s32.totalorder %v300, 1
      %vm309 = vcmp.eq.s32.totalorder %v301, 1
      %vm310 = vcmp.eq.s32.totalorder %v302, 1
      %vm311 = vcmp.eq.s32.totalorder %v303, 1
      %vm312 = vcmp.eq.s32.totalorder %v304, 1
      %v313 = vsel %vm305, %v170, 0.0
      %v314 = vsel %vm306, %v171, 0.0
      %v315 = vsel %vm307, %v172, 0.0
      %v316 = vsel %vm308, %v173, 0.0
      %v317 = vsel %vm309, %v174, 0.0
      %v318 = vsel %vm310, %v175, 0.0
      %v319 = vsel %vm311, %v176, 0.0
      %v320 = vsel %vm312, %v177, 0.0
      %v321 = vsel %vm193, %v313, 0.0
      %v322 = vsel %vm193, %v314, 0.0
      %v323 = vadd.f32 %v321, %v322
      %v324 = vsel %vm193, %v315, 0.0
      %v325 = vadd.f32 %v323, %v324
      %v326 = vsel %vm193, %v316, 0.0
      %v327 = vadd.f32 %v325, %v326
      %v328 = vsel %vm193, %v317, 0.0
      %v329 = vadd.f32 %v327, %v328
      %v330 = vsel %vm193, %v318, 0.0
      %v331 = vadd.f32 %v329, %v330
      %v332 = vsel %vm193, %v319, 0.0
      %v333 = vadd.f32 %v331, %v332
      %v334 = vsel %vm193, %v320, 0.0
      %v335 = vadd.f32 %v333, %v334
      %v336 = vrot.slane %v335, 4
      %v337 = vadd.f32 %v335, %v336
      %v338 = vrot.slane %v337, 2
      %v339 = vadd.f32 %v337, %v338
      %v340 = vrot.slane %v339, 1
      %v341 = vadd.f32 %v339, %v340
      %vm342 = vcmask 253952
      %343 = vst.msk [vmem:[%s169] sm:$0x1] %vm342, %v341
      %v344 = vsel %vm289, -inf, %v220
      %v345 = vsel %vm290, -inf, %v221
      %v346 = vsel %vm291, -inf, %v222
      %v347 = vsel %vm292, -inf, %v223
      %v348 = vsel %vm293, -inf, %v224
      %v349 = vsel %vm294, -inf, %v225
      %v350 = vsel %vm295, -inf, %v226
      %v351 = vsel %vm296, -inf, %v227
      %v352 = vmax.f32 %v344, %v348
      %v353 = vmax.f32 %v345, %v349
      %v354 = vmax.f32 %v346, %v350
      %v355 = vmax.f32 %v347, %v351
      %v356 = vmax.f32 %v352, %v353
      %v357 = vmax.f32 %v354, %v355
      %v358 = vmax.f32 %v356, %v357
      %v359 = vrot.slane %v358, 4
      %v360 = vmax.f32 %v358, %v359
      %v361 = vrot.slane %v360, 2
      %v362 = vmax.f32 %v360, %v361
      %v363 = vrot.slane %v362, 1
      %v364 = vmax.f32 %v362, %v363
      %vm365 = vcmp.eq.f32.partialorder %v344, %v364
      %vm366 = vcmp.eq.f32.partialorder %v345, %v364
      %vm367 = vcmp.eq.f32.partialorder %v346, %v364
      %vm368 = vcmp.eq.f32.partialorder %v347, %v364
      %vm369 = vcmp.eq.f32.partialorder %v348, %v364
      %vm370 = vcmp.eq.f32.partialorder %v349, %v364
      %vm371 = vcmp.eq.f32.partialorder %v350, %v364
      %vm372 = vcmp.eq.f32.partialorder %v351, %v364
      %v373 = vsel %vm365, %v229, 64
      %v374 = vsel %vm366, %v230, 64
      %v375 = vsel %vm367, %v231, 64
      %v376 = vsel %vm368, %v232, 64
      %v377 = vsel %vm369, %v233, 64
      %v378 = vsel %vm370, %v234, 64
      %v379 = vsel %vm371, %v235, 64
      %v380 = vsel %vm372, %v236, 64
      %vm381 = vcmp.lt.s32.totalorder %v373, %v377
      %v382 = vsel %vm381, %v373, %v377
      %vm383 = vcmp.lt.s32.totalorder %v374, %v378
      %v384 = vsel %vm383, %v374, %v378
      %vm385 = vcmp.lt.s32.totalorder %v375, %v379
      %v386 = vsel %vm385, %v375, %v379
      %vm387 = vcmp.lt.s32.totalorder %v376, %v380
      %v388 = vsel %vm387, %v376, %v380
      %vm389 = vcmp.lt.s32.totalorder %v382, %v384
      %v390 = vsel %vm389, %v382, %v384
      %vm391 = vcmp.lt.s32.totalorder %v386, %v388
      %v392 = vsel %vm391, %v386, %v388
      %vm393 = vcmp.lt.s32.totalorder %v390, %v392
      %v394 = vsel %vm393, %v390, %v392
      %v395 = vrot.slane %v394, 4
      %vm396 = vcmp.lt.s32.totalorder %v394, %v395
      %v397 = vsel %vm396, %v394, %v395
      %v398 = vrot.slane %v397, 2
      %vm399 = vcmp.lt.s32.totalorder %v397, %v398
      %v400 = vsel %vm399, %v397, %v398
      %v401 = vrot.slane %v400, 1
      %vm402 = vcmp.lt.s32.totalorder %v400, %v401
      %v403 = vsel %vm402, %v400, %v401
      %vm404 = vcmp.eq.s32.totalorder %v229, %v403
      %vm405 = vcmp.eq.s32.totalorder %v230, %v403
      %vm406 = vcmp.eq.s32.totalorder %v231, %v403
      %vm407 = vcmp.eq.s32.totalorder %v232, %v403
      %vm408 = vcmp.eq.s32.totalorder %v233, %v403
      %vm409 = vcmp.eq.s32.totalorder %v234, %v403
      %vm410 = vcmp.eq.s32.totalorder %v235, %v403
      %vm411 = vcmp.eq.s32.totalorder %v236, %v403
      %v412 = vsel %vm404, 1, 0
      %v413 = vsel %vm405, 1, 0
      %v414 = vsel %vm406, 1, 0
      %v415 = vsel %vm407, 1, 0
      %v416 = vsel %vm408, 1, 0
      %v417 = vsel %vm409, 1, 0
      %v418 = vsel %vm410, 1, 0
      %v419 = vsel %vm411, 1, 0
      %vm420 = vcmp.eq.s32.totalorder %v412, 1
      %vm421 = vcmp.eq.s32.totalorder %v413, 1
      %vm422 = vcmp.eq.s32.totalorder %v414, 1
      %vm423 = vcmp.eq.s32.totalorder %v415, 1
      %vm424 = vcmp.eq.s32.totalorder %v416, 1
      %vm425 = vcmp.eq.s32.totalorder %v417, 1
      %vm426 = vcmp.eq.s32.totalorder %v418, 1
      %vm427 = vcmp.eq.s32.totalorder %v419, 1
      %v428 = vsel %vm420, %v170, 0.0
      %v429 = vsel %vm421, %v171, 0.0
      %v430 = vsel %vm422, %v172, 0.0
      %v431 = vsel %vm423, %v173, 0.0
      %v432 = vsel %vm424, %v174, 0.0
      %v433 = vsel %vm425, %v175, 0.0
      %v434 = vsel %vm426, %v176, 0.0
      %v435 = vsel %vm427, %v177, 0.0
      %v436 = vsel %vm193, %v428, 0.0
      %v437 = vsel %vm193, %v429, 0.0
      %v438 = vadd.f32 %v436, %v437
      %v439 = vsel %vm193, %v430, 0.0
      %v440 = vadd.f32 %v438, %v439
      %v441 = vsel %vm193, %v431, 0.0
      %v442 = vadd.f32 %v440, %v441
      %v443 = vsel %vm193, %v432, 0.0
      %v444 = vadd.f32 %v442, %v443
      %v445 = vsel %vm193, %v433, 0.0
      %v446 = vadd.f32 %v444, %v445
      %v447 = vsel %vm193, %v434, 0.0
      %v448 = vadd.f32 %v446, %v447
      %v449 = vsel %vm193, %v435, 0.0
      %v450 = vadd.f32 %v448, %v449
      %v451 = vrot.slane %v450, 4
      %v452 = vadd.f32 %v450, %v451
      %v453 = vrot.slane %v452, 2
      %v454 = vadd.f32 %v452, %v453
      %v455 = vrot.slane %v454, 1
      %v456 = vadd.f32 %v454, %v455
      %457 = vst.msk [vmem:[%s169 + $0x1] sm:$0x1] %vm342, %v456
      %v458 = vsel %vm404, -inf, %v344
      %v459 = vsel %vm405, -inf, %v345
      %v460 = vsel %vm406, -inf, %v346
      %v461 = vsel %vm407, -inf, %v347
      %v462 = vsel %vm408, -inf, %v348
      %v463 = vsel %vm409, -inf, %v349
      %v464 = vsel %vm410, -inf, %v350
      %v465 = vsel %vm411, -inf, %v351
      %v466 = vmax.f32 %v458, %v462
      %v467 = vmax.f32 %v459, %v463
      %v468 = vmax.f32 %v460, %v464
      %v469 = vmax.f32 %v461, %v465
      %v470 = vmax.f32 %v466, %v467
      %v471 = vmax.f32 %v468, %v469
      %v472 = vmax.f32 %v470, %v471
      %v473 = vrot.slane %v472, 4
      %v474 = vmax.f32 %v472, %v473
      %v475 = vrot.slane %v474, 2
      %v476 = vmax.f32 %v474, %v475
      %v477 = vrot.slane %v476, 1
      %v478 = vmax.f32 %v476, %v477
      %vm479 = vcmp.eq.f32.partialorder %v458, %v478
      %vm480 = vcmp.eq.f32.partialorder %v459, %v478
      %vm481 = vcmp.eq.f32.partialorder %v460, %v478
      %vm482 = vcmp.eq.f32.partialorder %v461, %v478
      %vm483 = vcmp.eq.f32.partialorder %v462, %v478
      %vm484 = vcmp.eq.f32.partialorder %v463, %v478
      %vm485 = vcmp.eq.f32.partialorder %v464, %v478
      %vm486 = vcmp.eq.f32.partialorder %v465, %v478
      %v487 = vsel %vm479, %v229, 64
      %v488 = vsel %vm480, %v230, 64
      %v489 = vsel %vm481, %v231, 64
      %v490 = vsel %vm482, %v232, 64
      %v491 = vsel %vm483, %v233, 64
      %v492 = vsel %vm484, %v234, 64
      %v493 = vsel %vm485, %v235, 64
      %v494 = vsel %vm486, %v236, 64
      %vm495 = vcmp.lt.s32.totalorder %v487, %v491
      %v496 = vsel %vm495, %v487, %v491
      %vm497 = vcmp.lt.s32.totalorder %v488, %v492
      %v498 = vsel %vm497, %v488, %v492
      %vm499 = vcmp.lt.s32.totalorder %v489, %v493
      %v500 = vsel %vm499, %v489, %v493
      %vm501 = vcmp.lt.s32.totalorder %v490, %v494
      %v502 = vsel %vm501, %v490, %v494
      %vm503 = vcmp.lt.s32.totalorder %v496, %v498
      %v504 = vsel %vm503, %v496, %v498
      %vm505 = vcmp.lt.s32.totalorder %v500, %v502
      %v506 = vsel %vm505, %v500, %v502
      %vm507 = vcmp.lt.s32.totalorder %v504, %v506
      %v508 = vsel %vm507, %v504, %v506
      %v509 = vrot.slane %v508, 4
      %vm510 = vcmp.lt.s32.totalorder %v508, %v509
      %v511 = vsel %vm510, %v508, %v509
      %v512 = vrot.slane %v511, 2
      %vm513 = vcmp.lt.s32.totalorder %v511, %v512
      %v514 = vsel %vm513, %v511, %v512
      %v515 = vrot.slane %v514, 1
      %vm516 = vcmp.lt.s32.totalorder %v514, %v515
      %v517 = vsel %vm516, %v514, %v515
      %vm518 = vcmp.eq.s32.totalorder %v229, %v517
      %vm519 = vcmp.eq.s32.totalorder %v230, %v517
      %vm520 = vcmp.eq.s32.totalorder %v231, %v517
      %vm521 = vcmp.eq.s32.totalorder %v232, %v517
      %vm522 = vcmp.eq.s32.totalorder %v233, %v517
      %vm523 = vcmp.eq.s32.totalorder %v234, %v517
      %vm524 = vcmp.eq.s32.totalorder %v235, %v517
      %vm525 = vcmp.eq.s32.totalorder %v236, %v517
      %v526 = vsel %vm518, 1, 0
      %v527 = vsel %vm519, 1, 0
      %v528 = vsel %vm520, 1, 0
      %v529 = vsel %vm521, 1, 0
      %v530 = vsel %vm522, 1, 0
      %v531 = vsel %vm523, 1, 0
      %v532 = vsel %vm524, 1, 0
      %v533 = vsel %vm525, 1, 0
      %vm534 = vcmp.eq.s32.totalorder %v526, 1
      %vm535 = vcmp.eq.s32.totalorder %v527, 1
      %vm536 = vcmp.eq.s32.totalorder %v528, 1
      %vm537 = vcmp.eq.s32.totalorder %v529, 1
      %vm538 = vcmp.eq.s32.totalorder %v530, 1
      %vm539 = vcmp.eq.s32.totalorder %v531, 1
      %vm540 = vcmp.eq.s32.totalorder %v532, 1
      %vm541 = vcmp.eq.s32.totalorder %v533, 1
      %v542 = vsel %vm534, %v170, 0.0
      %v543 = vsel %vm535, %v171, 0.0
      %v544 = vsel %vm536, %v172, 0.0
      %v545 = vsel %vm537, %v173, 0.0
      %v546 = vsel %vm538, %v174, 0.0
      %v547 = vsel %vm539, %v175, 0.0
      %v548 = vsel %vm540, %v176, 0.0
      %v549 = vsel %vm541, %v177, 0.0
      %v550 = vsel %vm193, %v542, 0.0
      %v551 = vsel %vm193, %v543, 0.0
      %v552 = vadd.f32 %v550, %v551
      %v553 = vsel %vm193, %v544, 0.0
      %v554 = vadd.f32 %v552, %v553
      %v555 = vsel %vm193, %v545, 0.0
      %v556 = vadd.f32 %v554, %v555
      %v557 = vsel %vm193, %v546, 0.0
      %v558 = vadd.f32 %v556, %v557
      %v559 = vsel %vm193, %v547, 0.0
      %v560 = vadd.f32 %v558, %v559
      %v561 = vsel %vm193, %v548, 0.0
      %v562 = vadd.f32 %v560, %v561
      %v563 = vsel %vm193, %v549, 0.0
      %v564 = vadd.f32 %v562, %v563
      %v565 = vrot.slane %v564, 4
      %v566 = vadd.f32 %v564, %v565
      %v567 = vrot.slane %v566, 2
      %v568 = vadd.f32 %v566, %v567
      %v569 = vrot.slane %v568, 1
      %v570 = vadd.f32 %v568, %v569
      %571 = vst.msk [vmem:[%s169 + $0x2] sm:$0x1] %vm342, %v570
      %v572 = vsel %vm518, -inf, %v458
      %v573 = vsel %vm519, -inf, %v459
      %v574 = vsel %vm520, -inf, %v460
      %v575 = vsel %vm521, -inf, %v461
      %v576 = vsel %vm522, -inf, %v462
      %v577 = vsel %vm523, -inf, %v463
      %v578 = vsel %vm524, -inf, %v464
      %v579 = vsel %vm525, -inf, %v465
      %v580 = vmax.f32 %v572, %v576
      %v581 = vmax.f32 %v573, %v577
      %v582 = vmax.f32 %v574, %v578
      %v583 = vmax.f32 %v575, %v579
      %v584 = vmax.f32 %v580, %v581
      %v585 = vmax.f32 %v582, %v583
      %v586 = vmax.f32 %v584, %v585
      %v587 = vrot.slane %v586, 4
      %v588 = vmax.f32 %v586, %v587
      %v589 = vrot.slane %v588, 2
      %v590 = vmax.f32 %v588, %v589
      %v591 = vrot.slane %v590, 1
      %v592 = vmax.f32 %v590, %v591
      %vm593 = vcmp.eq.f32.partialorder %v572, %v592
      %vm594 = vcmp.eq.f32.partialorder %v573, %v592
      %vm595 = vcmp.eq.f32.partialorder %v574, %v592
      %vm596 = vcmp.eq.f32.partialorder %v575, %v592
      %vm597 = vcmp.eq.f32.partialorder %v576, %v592
      %vm598 = vcmp.eq.f32.partialorder %v577, %v592
      %vm599 = vcmp.eq.f32.partialorder %v578, %v592
      %vm600 = vcmp.eq.f32.partialorder %v579, %v592
      %v601 = vsel %vm593, %v229, 64
      %v602 = vsel %vm594, %v230, 64
      %v603 = vsel %vm595, %v231, 64
      %v604 = vsel %vm596, %v232, 64
      %v605 = vsel %vm597, %v233, 64
      %v606 = vsel %vm598, %v234, 64
      %v607 = vsel %vm599, %v235, 64
      %v608 = vsel %vm600, %v236, 64
      %vm609 = vcmp.lt.s32.totalorder %v601, %v605
      %v610 = vsel %vm609, %v601, %v605
      %vm611 = vcmp.lt.s32.totalorder %v602, %v606
      %v612 = vsel %vm611, %v602, %v606
      %vm613 = vcmp.lt.s32.totalorder %v603, %v607
      %v614 = vsel %vm613, %v603, %v607
      %vm615 = vcmp.lt.s32.totalorder %v604, %v608
      %v616 = vsel %vm615, %v604, %v608
      %vm617 = vcmp.lt.s32.totalorder %v610, %v612
      %v618 = vsel %vm617, %v610, %v612
      %vm619 = vcmp.lt.s32.totalorder %v614, %v616
      %v620 = vsel %vm619, %v614, %v616
      %vm621 = vcmp.lt.s32.totalorder %v618, %v620
      %v622 = vsel %vm621, %v618, %v620
      %v623 = vrot.slane %v622, 4
      %vm624 = vcmp.lt.s32.totalorder %v622, %v623
      %v625 = vsel %vm624, %v622, %v623
      %v626 = vrot.slane %v625, 2
      %vm627 = vcmp.lt.s32.totalorder %v625, %v626
      %v628 = vsel %vm627, %v625, %v626
      %v629 = vrot.slane %v628, 1
      %vm630 = vcmp.lt.s32.totalorder %v628, %v629
      %v631 = vsel %vm630, %v628, %v629
      %vm632 = vcmp.eq.s32.totalorder %v229, %v631
      %vm633 = vcmp.eq.s32.totalorder %v230, %v631
      %vm634 = vcmp.eq.s32.totalorder %v231, %v631
      %vm635 = vcmp.eq.s32.totalorder %v232, %v631
      %vm636 = vcmp.eq.s32.totalorder %v233, %v631
      %vm637 = vcmp.eq.s32.totalorder %v234, %v631
      %vm638 = vcmp.eq.s32.totalorder %v235, %v631
      %vm639 = vcmp.eq.s32.totalorder %v236, %v631
      %v640 = vsel %vm632, 1, 0
      %v641 = vsel %vm633, 1, 0
      %v642 = vsel %vm634, 1, 0
      %v643 = vsel %vm635, 1, 0
      %v644 = vsel %vm636, 1, 0
      %v645 = vsel %vm637, 1, 0
      %v646 = vsel %vm638, 1, 0
      %v647 = vsel %vm639, 1, 0
      %vm648 = vcmp.eq.s32.totalorder %v640, 1
      %vm649 = vcmp.eq.s32.totalorder %v641, 1
      %vm650 = vcmp.eq.s32.totalorder %v642, 1
      %vm651 = vcmp.eq.s32.totalorder %v643, 1
      %vm652 = vcmp.eq.s32.totalorder %v644, 1
      %vm653 = vcmp.eq.s32.totalorder %v645, 1
      %vm654 = vcmp.eq.s32.totalorder %v646, 1
      %vm655 = vcmp.eq.s32.totalorder %v647, 1
      %v656 = vsel %vm648, %v170, 0.0
      %v657 = vsel %vm649, %v171, 0.0
      %v658 = vsel %vm650, %v172, 0.0
      %v659 = vsel %vm651, %v173, 0.0
      %v660 = vsel %vm652, %v174, 0.0
      %v661 = vsel %vm653, %v175, 0.0
      %v662 = vsel %vm654, %v176, 0.0
      %v663 = vsel %vm655, %v177, 0.0
      %v664 = vsel %vm193, %v656, 0.0
      %v665 = vsel %vm193, %v657, 0.0
      %v666 = vadd.f32 %v664, %v665
      %v667 = vsel %vm193, %v658, 0.0
      %v668 = vadd.f32 %v666, %v667
      %v669 = vsel %vm193, %v659, 0.0
      %v670 = vadd.f32 %v668, %v669
      %v671 = vsel %vm193, %v660, 0.0
      %v672 = vadd.f32 %v670, %v671
      %v673 = vsel %vm193, %v661, 0.0
      %v674 = vadd.f32 %v672, %v673
      %v675 = vsel %vm193, %v662, 0.0
      %v676 = vadd.f32 %v674, %v675
      %v677 = vsel %vm193, %v663, 0.0
      %v678 = vadd.f32 %v676, %v677
      %v679 = vrot.slane %v678, 4
      %v680 = vadd.f32 %v678, %v679
      %v681 = vrot.slane %v680, 2
      %v682 = vadd.f32 %v680, %v681
      %v683 = vrot.slane %v682, 1
      %v684 = vadd.f32 %v682, %v683
      %685 = vst.msk [vmem:[%s169 + $0x3] sm:$0x1] %vm342, %v684
      %v686 = vsel %vm632, -inf, %v572
      %v687 = vsel %vm633, -inf, %v573
      %v688 = vsel %vm634, -inf, %v574
      %v689 = vsel %vm635, -inf, %v575
      %v690 = vsel %vm636, -inf, %v576
      %v691 = vsel %vm637, -inf, %v577
      %v692 = vsel %vm638, -inf, %v578
      %v693 = vsel %vm639, -inf, %v579
      %v694 = vmax.f32 %v686, %v690
      %v695 = vmax.f32 %v687, %v691
      %v696 = vmax.f32 %v688, %v692
      %v697 = vmax.f32 %v689, %v693
      %v698 = vmax.f32 %v694, %v695
      %v699 = vmax.f32 %v696, %v697
      %v700 = vmax.f32 %v698, %v699
      %v701 = vrot.slane %v700, 4
      %v702 = vmax.f32 %v700, %v701
      %v703 = vrot.slane %v702, 2
      %v704 = vmax.f32 %v702, %v703
      %v705 = vrot.slane %v704, 1
      %v706 = vmax.f32 %v704, %v705
      %vm707 = vcmp.eq.f32.partialorder %v686, %v706
      %vm708 = vcmp.eq.f32.partialorder %v687, %v706
      %vm709 = vcmp.eq.f32.partialorder %v688, %v706
      %vm710 = vcmp.eq.f32.partialorder %v689, %v706
      %vm711 = vcmp.eq.f32.partialorder %v690, %v706
      %vm712 = vcmp.eq.f32.partialorder %v691, %v706
      %vm713 = vcmp.eq.f32.partialorder %v692, %v706
      %vm714 = vcmp.eq.f32.partialorder %v693, %v706
      %v715 = vsel %vm707, %v229, 64
      %v716 = vsel %vm708, %v230, 64
      %v717 = vsel %vm709, %v231, 64
      %v718 = vsel %vm710, %v232, 64
      %v719 = vsel %vm711, %v233, 64
      %v720 = vsel %vm712, %v234, 64
      %v721 = vsel %vm713, %v235, 64
      %v722 = vsel %vm714, %v236, 64
      %vm723 = vcmp.lt.s32.totalorder %v715, %v719
      %v724 = vsel %vm723, %v715, %v719
      %vm725 = vcmp.lt.s32.totalorder %v716, %v720
      %v726 = vsel %vm725, %v716, %v720
      %vm727 = vcmp.lt.s32.totalorder %v717, %v721
      %v728 = vsel %vm727, %v717, %v721
      %vm729 = vcmp.lt.s32.totalorder %v718, %v722
      %v730 = vsel %vm729, %v718, %v722
      %vm731 = vcmp.lt.s32.totalorder %v724, %v726
      %v732 = vsel %vm731, %v724, %v726
      %vm733 = vcmp.lt.s32.totalorder %v728, %v730
      %v734 = vsel %vm733, %v728, %v730
      %vm735 = vcmp.lt.s32.totalorder %v732, %v734
      %v736 = vsel %vm735, %v732, %v734
      %v737 = vrot.slane %v736, 4
      %vm738 = vcmp.lt.s32.totalorder %v736, %v737
      %v739 = vsel %vm738, %v736, %v737
      %v740 = vrot.slane %v739, 2
      %vm741 = vcmp.lt.s32.totalorder %v739, %v740
      %v742 = vsel %vm741, %v739, %v740
      %v743 = vrot.slane %v742, 1
      %vm744 = vcmp.lt.s32.totalorder %v742, %v743
      %v745 = vsel %vm744, %v742, %v743
      %vm746 = vcmp.eq.s32.totalorder %v229, %v745
      %vm747 = vcmp.eq.s32.totalorder %v230, %v745
      %vm748 = vcmp.eq.s32.totalorder %v231, %v745
      %vm749 = vcmp.eq.s32.totalorder %v232, %v745
      %vm750 = vcmp.eq.s32.totalorder %v233, %v745
      %vm751 = vcmp.eq.s32.totalorder %v234, %v745
      %vm752 = vcmp.eq.s32.totalorder %v235, %v745
      %vm753 = vcmp.eq.s32.totalorder %v236, %v745
      %v754 = vsel %vm746, 1, 0
      %v755 = vsel %vm747, 1, 0
      %v756 = vsel %vm748, 1, 0
      %v757 = vsel %vm749, 1, 0
      %v758 = vsel %vm750, 1, 0
      %v759 = vsel %vm751, 1, 0
      %v760 = vsel %vm752, 1, 0
      %v761 = vsel %vm753, 1, 0
      %vm762 = vcmp.eq.s32.totalorder %v754, 1
      %vm763 = vcmp.eq.s32.totalorder %v755, 1
      %vm764 = vcmp.eq.s32.totalorder %v756, 1
      %vm765 = vcmp.eq.s32.totalorder %v757, 1
      %vm766 = vcmp.eq.s32.totalorder %v758, 1
      %vm767 = vcmp.eq.s32.totalorder %v759, 1
      %vm768 = vcmp.eq.s32.totalorder %v760, 1
      %vm769 = vcmp.eq.s32.totalorder %v761, 1
      %v770 = vsel %vm762, %v170, 0.0
      %v771 = vsel %vm763, %v171, 0.0
      %v772 = vsel %vm764, %v172, 0.0
      %v773 = vsel %vm765, %v173, 0.0
      %v774 = vsel %vm766, %v174, 0.0
      %v775 = vsel %vm767, %v175, 0.0
      %v776 = vsel %vm768, %v176, 0.0
      %v777 = vsel %vm769, %v177, 0.0
      %v778 = vsel %vm193, %v770, 0.0
      %v779 = vsel %vm193, %v771, 0.0
      %v780 = vadd.f32 %v778, %v779
      %v781 = vsel %vm193, %v772, 0.0
      %v782 = vadd.f32 %v780, %v781
      %v783 = vsel %vm193, %v773, 0.0
      %v784 = vadd.f32 %v782, %v783
      %v785 = vsel %vm193, %v774, 0.0
      %v786 = vadd.f32 %v784, %v785
      %v787 = vsel %vm193, %v775, 0.0
      %v788 = vadd.f32 %v786, %v787
      %v789 = vsel %vm193, %v776, 0.0
      %v790 = vadd.f32 %v788, %v789
      %v791 = vsel %vm193, %v777, 0.0
      %v792 = vadd.f32 %v790, %v791
      %v793 = vrot.slane %v792, 4
      %v794 = vadd.f32 %v792, %v793
      %v795 = vrot.slane %v794, 2
      %v796 = vadd.f32 %v794, %v795
      %v797 = vrot.slane %v796, 1
      %v798 = vadd.f32 %v796, %v797
      %799 = vst.msk [vmem:[%s169 + $0x4] sm:$0x1] %vm342, %v798
      %v800 = vsel %vm746, -inf, %v686
      %v801 = vsel %vm747, -inf, %v687
      %v802 = vsel %vm748, -inf, %v688
      %v803 = vsel %vm749, -inf, %v689
      %v804 = vsel %vm750, -inf, %v690
      %v805 = vsel %vm751, -inf, %v691
      %v806 = vsel %vm752, -inf, %v692
      %v807 = vsel %vm753, -inf, %v693
      %v808 = vmax.f32 %v800, %v804
      %v809 = vmax.f32 %v801, %v805
      %v810 = vmax.f32 %v802, %v806
      %v811 = vmax.f32 %v803, %v807
      %v812 = vmax.f32 %v808, %v809
      %v813 = vmax.f32 %v810, %v811
      %v814 = vmax.f32 %v812, %v813
      %v815 = vrot.slane %v814, 4
      %v816 = vmax.f32 %v814, %v815
      %v817 = vrot.slane %v816, 2
      %v818 = vmax.f32 %v816, %v817
      %v819 = vrot.slane %v818, 1
      %v820 = vmax.f32 %v818, %v819
      %vm821 = vcmp.eq.f32.partialorder %v800, %v820
      %vm822 = vcmp.eq.f32.partialorder %v801, %v820
      %vm823 = vcmp.eq.f32.partialorder %v802, %v820
      %vm824 = vcmp.eq.f32.partialorder %v803, %v820
      %vm825 = vcmp.eq.f32.partialorder %v804, %v820
      %vm826 = vcmp.eq.f32.partialorder %v805, %v820
      %vm827 = vcmp.eq.f32.partialorder %v806, %v820
      %vm828 = vcmp.eq.f32.partialorder %v807, %v820
      %v829 = vsel %vm821, %v229, 64
      %v830 = vsel %vm822, %v230, 64
      %v831 = vsel %vm823, %v231, 64
      %v832 = vsel %vm824, %v232, 64
      %v833 = vsel %vm825, %v233, 64
      %v834 = vsel %vm826, %v234, 64
      %v835 = vsel %vm827, %v235, 64
      %v836 = vsel %vm828, %v236, 64
      %vm837 = vcmp.lt.s32.totalorder %v829, %v833
      %v838 = vsel %vm837, %v829, %v833
      %vm839 = vcmp.lt.s32.totalorder %v830, %v834
      %v840 = vsel %vm839, %v830, %v834
      %vm841 = vcmp.lt.s32.totalorder %v831, %v835
      %v842 = vsel %vm841, %v831, %v835
      %vm843 = vcmp.lt.s32.totalorder %v832, %v836
      %v844 = vsel %vm843, %v832, %v836
      %vm845 = vcmp.lt.s32.totalorder %v838, %v840
      %v846 = vsel %vm845, %v838, %v840
      %vm847 = vcmp.lt.s32.totalorder %v842, %v844
      %v848 = vsel %vm847, %v842, %v844
      %vm849 = vcmp.lt.s32.totalorder %v846, %v848
      %v850 = vsel %vm849, %v846, %v848
      %v851 = vrot.slane %v850, 4
      %vm852 = vcmp.lt.s32.totalorder %v850, %v851
      %v853 = vsel %vm852, %v850, %v851
      %v854 = vrot.slane %v853, 2
      %vm855 = vcmp.lt.s32.totalorder %v853, %v854
      %v856 = vsel %vm855, %v853, %v854
      %v857 = vrot.slane %v856, 1
      %vm858 = vcmp.lt.s32.totalorder %v856, %v857
      %v859 = vsel %vm858, %v856, %v857
      %vm860 = vcmp.eq.s32.totalorder %v229, %v859
      %vm861 = vcmp.eq.s32.totalorder %v230, %v859
      %vm862 = vcmp.eq.s32.totalorder %v231, %v859
      %vm863 = vcmp.eq.s32.totalorder %v232, %v859
      %vm864 = vcmp.eq.s32.totalorder %v233, %v859
      %vm865 = vcmp.eq.s32.totalorder %v234, %v859
      %vm866 = vcmp.eq.s32.totalorder %v235, %v859
      %vm867 = vcmp.eq.s32.totalorder %v236, %v859
      %v868 = vsel %vm860, 1, 0
      %v869 = vsel %vm861, 1, 0
      %v870 = vsel %vm862, 1, 0
      %v871 = vsel %vm863, 1, 0
      %v872 = vsel %vm864, 1, 0
      %v873 = vsel %vm865, 1, 0
      %v874 = vsel %vm866, 1, 0
      %v875 = vsel %vm867, 1, 0
      %vm876 = vcmp.eq.s32.totalorder %v868, 1
      %vm877 = vcmp.eq.s32.totalorder %v869, 1
      %vm878 = vcmp.eq.s32.totalorder %v870, 1
      %vm879 = vcmp.eq.s32.totalorder %v871, 1
      %vm880 = vcmp.eq.s32.totalorder %v872, 1
      %vm881 = vcmp.eq.s32.totalorder %v873, 1
      %vm882 = vcmp.eq.s32.totalorder %v874, 1
      %vm883 = vcmp.eq.s32.totalorder %v875, 1
      %v884 = vsel %vm876, %v170, 0.0
      %v885 = vsel %vm877, %v171, 0.0
      %v886 = vsel %vm878, %v172, 0.0
      %v887 = vsel %vm879, %v173, 0.0
      %v888 = vsel %vm880, %v174, 0.0
      %v889 = vsel %vm881, %v175, 0.0
      %v890 = vsel %vm882, %v176, 0.0
      %v891 = vsel %vm883, %v177, 0.0
      %v892 = vsel %vm193, %v884, 0.0
      %v893 = vsel %vm193, %v885, 0.0
      %v894 = vadd.f32 %v892, %v893
      %v895 = vsel %vm193, %v886, 0.0
      %v896 = vadd.f32 %v894, %v895
      %v897 = vsel %vm193, %v887, 0.0
      %v898 = vadd.f32 %v896, %v897
      %v899 = vsel %vm193, %v888, 0.0
      %v900 = vadd.f32 %v898, %v899
      %v901 = vsel %vm193, %v889, 0.0
      %v902 = vadd.f32 %v900, %v901
      %v903 = vsel %vm193, %v890, 0.0
      %v904 = vadd.f32 %v902, %v903
      %v905 = vsel %vm193, %v891, 0.0
      %v906 = vadd.f32 %v904, %v905
      %v907 = vrot.slane %v906, 4
      %v908 = vadd.f32 %v906, %v907
      %v909 = vrot.slane %v908, 2
      %v910 = vadd.f32 %v908, %v909
      %v911 = vrot.slane %v910, 1
      %v912 = vadd.f32 %v910, %v911
      %913 = vst.msk [vmem:[%s169 + $0x5] sm:$0x1] %vm342, %v912
      %p914 = scmp.lt.s32.totalorder %s15, 1
      %s915 = scalar_select %p914, %s15, 1
      %s916 = smul.addr %s915, 8
      %s917 = scalar_lea.vmem %s3, %s916
      // Predicated region
      $region33: #{tpu_custom_call.1} parent=31 // pred_check
        %p918 = pneg %p101
      $region34: #{tpu_custom_call.1} parent=31 // pred_check_branch
        %920 = sbr.rel (%p918) target = $region36
      $region35: #{tpu_custom_call.1} parent=31 // pred_region
        _
      $region36: #{tpu_custom_call.1} parent=31 // pred_fallthru
        _
    $region32: #{tpu_custom_call.1} parent=5 // pred_fallthru
      _
    %p921 = scmp.le.s32.totalorder 2, %s10
    // Predicated region
    $region37: #{tpu_custom_call.1} parent=5 // pred_check
      %p922 = pneg %p921
    $region38: #{tpu_custom_call.1} parent=5 // pred_check_branch
      %924 = sbr.rel (%p922) target = $region40
    $region39: #{tpu_custom_call.1} parent=5 // pred_region
      %s925 = ssub.s32 %s10, 2
      // Predicated region
      $region41: #{tpu_custom_call.1} parent=39 // pred_check
        %p926 = pneg %p107
      $region42: #{tpu_custom_call.1} parent=39 // pred_check_branch
        %928 = sbr.rel (%p926) target = $region44
      $region43: #{tpu_custom_call.1} parent=39 // pred_region
        %p929 = scmp.lt.s32.totalorder %s16, 1
        %s930 = scalar_select %p929, %s16, 1
        %s931 = smul.addr %s930, 8
        %s932 = scalar_lea.vmem %s3, %s931
      $region44: #{tpu_custom_call.1} parent=39 // pred_fallthru
        _
    $region40: #{tpu_custom_call.1} parent=5 // pred_fallthru
      _
  $region6: #{tpu_custom_call.1} parent=0 // loop_footer
    %s14 = sadd.s32 1, %s10
  $region7: #{tpu_custom_call.1} parent=0 // loop_footer_branch
    %9 = sbr.rel target = $region3
  $region8: #{tpu_custom_call.1} parent=0 // loop_exit
    _

</llo_original>
